<compile_context>
chip_gen: v5e
topology: v5e:2x2
jax: 0.10.0
libtpu: 0.0.40
codegen_flags: <defaults>
</compile_context>

<pallas_src>
import functools

import jax
import jax.numpy as jnp
import numpy as np
from jax import lax
from jax.experimental import pallas as pl
from jax.experimental.pallas import tpu as pltpu


def _abe_loss_kernel(xf_ref, rmeta_ref, cmeta_ref, sel_ref, o_ref, *,
                     num_heads, n, lambda_div, margin_c, margin_div):
    """Refs:
        xf_ref:    (M*n, d)        f32  stacked learner embeddings
        rmeta_ref: (3, M*n)        i32  rows = [labels, head ids, anchor ids]
        cmeta_ref: (M*n, 3)        i32  same metadata, column-oriented
        sel_ref:   (2M+1, 3*M*n)   f32  selector for batched second-level sums
        o_ref:     (1, 1)          f32  scalar loss (SMEM)
    """
    mn = num_heads * n
    del mn  # shapes are static; kept for readability

    xf = xf_ref[...]                                               # (Mn, d)

    # Single Gram matmul on the MXU; contract d-vs-d so no transpose is needed.
    gram = lax.dot_general(xf, xf, (((1,), (1,)), ((), ())),
                           preferred_element_type=jnp.float32)      # (Mn, Mn)

    rmeta = rmeta_ref[...]                                         # (3, Mn)
    cmeta = cmeta_ref[...]                                         # (Mn, 3)
    t_row, h_row, a_row = rmeta[0:1, :], rmeta[1:2, :], rmeta[2:3, :]   # (1, Mn)
    t_col, h_col, a_col = cmeta[:, 0:1], cmeta[:, 1:2], cmeta[:, 2:3]   # (Mn, 1)

    same_lbl = t_row == t_col                                      # (Mn, Mn)
    same_head = h_row == h_col                                     # block-diagonal mask
    pos_mask = jnp.logical_and(jnp.logical_and(same_head, same_lbl), gram < 1.0)
    neg_mask = jnp.logical_and(same_head, jnp.logical_not(same_lbl))
    # Divergence entries: same anchor index, head(row) < head(col)  ->  pairs i < j.
    div_mask = jnp.logical_and(a_row == a_col, h_col < h_row)

    one = jnp.float32(1.0)
    zero = jnp.float32(0.0)

    # --- level-1: masked lane reductions over the single Gram matrix -----------
    pos_cnt = jnp.sum(jnp.where(pos_mask, one, zero),
                      axis=1, keepdims=True)                        # (Mn, 1)
    pos_sum = jnp.sum(jnp.where(pos_mask, jnp.maximum(margin_c - gram, 0.0), zero),
                      axis=1, keepdims=True)                        # (Mn, 1)
    neg_sum = jnp.sum(jnp.where(neg_mask, gram, zero),
                      axis=1, keepdims=True)                        # (Mn, 1)
    div_row = jnp.sum(jnp.where(div_mask, jnp.maximum(gram - margin_div, 0.0), zero),
                      axis=1, keepdims=True)                        # (Mn, 1)

    # neg_cnt does not depend on the head: compute once on the small (n, n) label
    # mask (hoisted) and replicate across heads with an aligned sublane concat.
    same_small = t_row[:, :n] == t_col[:n, :]                       # (n, n)
    neg_cnt_small = jnp.sum(jnp.where(same_small, zero, one),
                            axis=1, keepdims=True)                  # (n, 1)
    neg_cnt = jnp.concatenate([neg_cnt_small] * num_heads, axis=0)  # (Mn, 1)

    # --- per-anchor contrastive terms ------------------------------------------
    valid = jnp.logical_and(pos_cnt > 0.0, neg_cnt > 0.0)           # (Mn, 1)
    pos_loss = pos_sum / jnp.maximum(pos_cnt, 1.0)
    neg_loss = neg_sum / jnp.maximum(neg_cnt, 1.0)
    anchor_loss = jnp.where(valid, pos_loss + neg_loss, zero)       # (Mn, 1)
    valid_f = jnp.where(valid, one, zero)                           # (Mn, 1)

    # --- level-2: batch ALL remaining sums into one selector matvec ------------
    # stacked rows: [valid_f ; anchor_loss ; div_row]  ->  (3*Mn, 1)
    stacked = jnp.concatenate([valid_f, anchor_loss, div_row], axis=0)
    agg = lax.dot_general(sel_ref[...], stacked, (((1,), (0,)), ((), ())),
                          preferred_element_type=jnp.float32)       # (2M+1, 1)

    head_valid = agg[0:num_heads, :]                                # (M, 1)
    head_closs = agg[num_heads:2 * num_heads, :]                    # (M, 1)
    div_total = jnp.sum(agg[2 * num_heads:2 * num_heads + 1, :])    # scalar

    # NOTE: like the PyTorch reference, a head with zero valid anchors yields
    # inf/nan here (no guard, to keep semantics identical).
    contrastive = jnp.sum(head_closs / head_valid) / jnp.float32(num_heads)
    n_pairs = num_heads * (num_heads - 1) // 2
    div_loss = div_total / jnp.float32(n * n_pairs)

    o_ref[0, 0] = contrastive + jnp.float32(lambda_div) * div_loss


def abe_loss(x, target, *, lambda_div=0.05, margin_c=0.5, margin_div=0.2):
    """x: (M, n, d) float stacked learner embeddings; target: (n,) int labels."""
    M, n, d = x.shape
    assert M > 1
    Mn = M * n
    xf = x.astype(jnp.float32).reshape(Mn, d)

    # Row/column metadata: labels (tiled over heads), head ids, anchor ids.
    labels = jnp.tile(target.astype(jnp.int32), M)                          # (Mn,)
    heads_np = np.repeat(np.arange(M, dtype=np.int32), n)                   # (Mn,)
    anchors_np = np.tile(np.arange(n, dtype=np.int32), M)                   # (Mn,)
    row_meta = jnp.stack(
        [labels, jnp.asarray(heads_np), jnp.asarray(anchors_np)], axis=0)   # (3, Mn)
    col_meta = row_meta.T                                                   # (Mn, 3)

    # Selector matrix for the batched second-level sums (compile-time constant):
    #   rows 0..M-1   : per-head #valid anchors      (acts on stacked[0:Mn])
    #   rows M..2M-1  : per-head summed anchor loss  (acts on stacked[Mn:2Mn])
    #   row  2M       : total divergence hinge sum   (acts on stacked[2Mn:3Mn])
    sel_np = np.zeros((2 * M + 1, 3 * Mn), dtype=np.float32)
    sel_np[heads_np, np.arange(Mn)] = 1.0
    sel_np[M + heads_np, Mn + np.arange(Mn)] = 1.0
    sel_np[2 * M, 2 * Mn:] = 1.0
    sel = jnp.asarray(sel_np)

    kernel = functools.partial(
        _abe_loss_kernel,
        num_heads=M,
        n=n,
        lambda_div=float(lambda_div),
        margin_c=float(margin_c),
        margin_div=float(margin_div),
    )

    out = pl.pallas_call(
        kernel,
        out_shape=jax.ShapeDtypeStruct((1, 1), jnp.float32),
        # No grid: single invocation, every operand is one full-array block.
        in_specs=[
            pl.BlockSpec(memory_space=pltpu.MemorySpace.VMEM),   # xf
            pl.BlockSpec(memory_space=pltpu.MemorySpace.VMEM),   # row_meta
            pl.BlockSpec(memory_space=pltpu.MemorySpace.VMEM),   # col_meta
            pl.BlockSpec(memory_space=pltpu.MemorySpace.VMEM),   # sel
        ],
        out_specs=pl.BlockSpec(memory_space=pltpu.MemorySpace.SMEM),
    )(xf, row_meta, col_meta, sel)
    return out[0, 0]


def abe_loss_ref(x, target, *, lambda_div=0.05, margin_c=0.5, margin_div=0.2):
    """Pure-numpy reference mirroring the PyTorch forward exactly."""
    x = np.asarray(x, dtype=np.float32)
    target = np.asarray(target)
    M, n, _ = x.shape
    metric = [x[i] @ x[i].T for i in range(M)]
    con_losses = []
    for i in range(M):
        temp = []
        for j in range(n):
            row = metric[i][j]
            pos = row[target == target[j]]
            neg = row[target != target[j]]
            pos = pos[pos < 1.0]
            if len(pos) < 1 or len(neg) < 1:
                continue
            temp.append(np.maximum(margin_c - pos, 0.0).mean() + neg.mean())
        con_losses.append(sum(temp) / len(temp))
    con = sum(con_losses) / M
    divs = []
    for i in range(M - 1):
        for j in range(i + 1, M):
            dp = (x[i] * x[j]).sum(axis=1)
            divs.append(np.maximum(dp - margin_div, 0.0).mean())
    div = sum(divs) / len(divs)
    return np.float32(con + lambda_div * div)


if __name__ == "__main__":
    # Small shapes consistent with the module: M=4 learner heads, batch n=8, dim d=32.
    M, n, d = 4, 8, 32
    key = jax.random.PRNGKey(0)
    # Scale 0.25 keeps most similarities well away from the `< 1` filter boundary.
    x = 0.25 * jax.random.normal(key, (M, n, d), dtype=jnp.float32)
    # Two classes -> every anchor has positives and negatives.
    target = jnp.array([0, 0, 0, 0, 1, 1, 1, 1], dtype=jnp.int32)

    loss = abe_loss(x, target)
    loss = jax.block_until_ready(loss)

    ref = abe_loss_ref(np.asarray(x), np.asarray(target))
    np.testing.assert_allclose(np.asarray(loss), ref, rtol=1e-4, atol=1e-5)

    print("KERNEL_OK")
</pallas_src>

<mosaic_0001>
module attributes {stable_mosaic.version = 11 : i64} {
  func.func @_abe_loss_kernel(%arg0: memref<32x32xf32, #tpu.memory_space<vmem>>, %arg1: memref<3x32xi32, #tpu.memory_space<vmem>>, %arg2: memref<32x3xi32, #tpu.memory_space<vmem>>, %arg3: memref<9x96xf32, #tpu.memory_space<vmem>>, %arg4: memref<1x1xf32, #tpu.memory_space<smem>>) attributes {dimension_semantics = [], scalar_prefetch = 0 : i64, scratch_operands = 0 : i64, tpu.core_type = #tpu.core_type<tc>} {
    %c0 = arith.constant 0 : index
    %c0_0 = arith.constant 0 : index
    %0 = vector.load %arg0[%c0, %c0_0] : memref<32x32xf32, #tpu.memory_space<vmem>>, vector<32x32xf32>
    %cst = arith.constant dense<0.000000e+00> : vector<32x32xf32>
    %1 = tpu.matmul %0, %0, %cst {dimension_numbers = #tpu.dot_dimension_numbers<[1], [1], [0], [0], [0, 0, 1, 0], [], []>} : vector<32x32xf32>, vector<32x32xf32>, vector<32x32xf32> -> vector<32x32xf32>
    %c0_1 = arith.constant 0 : index
    %c0_2 = arith.constant 0 : index
    %2 = vector.load %arg1[%c0_1, %c0_2] : memref<3x32xi32, #tpu.memory_space<vmem>>, vector<3x32xi32>
    %c0_3 = arith.constant 0 : index
    %c0_4 = arith.constant 0 : index
    %3 = vector.load %arg2[%c0_3, %c0_4] : memref<32x3xi32, #tpu.memory_space<vmem>>, vector<32x3xi32>
    %4 = vector.extract_strided_slice %2 {offsets = [0, 0], sizes = [1, 32], strides = [1, 1]} : vector<3x32xi32> to vector<1x32xi32>
    %5 = vector.extract_strided_slice %2 {offsets = [1, 0], sizes = [1, 32], strides = [1, 1]} : vector<3x32xi32> to vector<1x32xi32>
    %6 = vector.extract_strided_slice %2 {offsets = [2, 0], sizes = [1, 32], strides = [1, 1]} : vector<3x32xi32> to vector<1x32xi32>
    %7 = vector.extract_strided_slice %3 {offsets = [0, 0], sizes = [32, 1], strides = [1, 1]} : vector<32x3xi32> to vector<32x1xi32>
    %8 = vector.extract_strided_slice %3 {offsets = [0, 1], sizes = [32, 1], strides = [1, 1]} : vector<32x3xi32> to vector<32x1xi32>
    %9 = vector.extract_strided_slice %3 {offsets = [0, 2], sizes = [32, 1], strides = [1, 1]} : vector<32x3xi32> to vector<32x1xi32>
    %10 = vector.broadcast %4 : vector<1x32xi32> to vector<32x32xi32>
    %11 = vector.broadcast %7 : vector<32x1xi32> to vector<32x32xi32>
    %12 = arith.cmpi eq, %10, %11 : vector<32x32xi32>
    %13 = vector.broadcast %5 : vector<1x32xi32> to vector<32x32xi32>
    %14 = vector.broadcast %8 : vector<32x1xi32> to vector<32x32xi32>
    %15 = arith.cmpi eq, %13, %14 : vector<32x32xi32>
    %16 = arith.andi %15, %12 : vector<32x32xi1>
    %cst_5 = arith.constant 1.000000e+00 : f32
    %17 = vector.broadcast %cst_5 : f32 to vector<32x32xf32>
    %18 = arith.cmpf olt, %1, %17 : vector<32x32xf32>
    %19 = arith.andi %16, %18 : vector<32x32xi1>
    %cst_6 = arith.constant dense<true> : vector<32x32xi1>
    %20 = arith.xori %12, %cst_6 : vector<32x32xi1>
    %21 = arith.andi %15, %20 : vector<32x32xi1>
    %22 = vector.broadcast %6 : vector<1x32xi32> to vector<32x32xi32>
    %23 = vector.broadcast %9 : vector<32x1xi32> to vector<32x32xi32>
    %24 = arith.cmpi eq, %22, %23 : vector<32x32xi32>
    %25 = vector.broadcast %8 : vector<32x1xi32> to vector<32x32xi32>
    %26 = vector.broadcast %5 : vector<1x32xi32> to vector<32x32xi32>
    %27 = arith.cmpi slt, %25, %26 : vector<32x32xi32>
    %28 = arith.andi %24, %27 : vector<32x32xi1>
    %cst_7 = arith.constant 1.000000e+00 : f32
    %cst_8 = arith.constant 0.000000e+00 : f32
    %29 = vector.broadcast %cst_7 : f32 to vector<32x32xf32>
    %30 = vector.broadcast %cst_8 : f32 to vector<32x32xf32>
    %31 = arith.select %19, %29, %30 : vector<32x32xi1>, vector<32x32xf32>
    %cst_9 = arith.constant dense<0.000000e+00> : vector<32xf32>
    %32 = vector.multi_reduction <add>, %31, %cst_9 [1] : vector<32x32xf32> to vector<32xf32>
    %33 = vector.shape_cast %32 : vector<32xf32> to vector<32x1xf32>
    %cst_10 = arith.constant 5.000000e-01 : f32
    %34 = vector.broadcast %cst_10 : f32 to vector<32x32xf32>
    %35 = arith.subf %34, %1 : vector<32x32xf32>
    %cst_11 = arith.constant 0.000000e+00 : f32
    %36 = vector.broadcast %cst_11 : f32 to vector<32x32xf32>
    %37 = arith.maximumf %35, %36 : vector<32x32xf32>
    %cst_12 = arith.constant 0.000000e+00 : f32
    %38 = vector.broadcast %cst_12 : f32 to vector<32x32xf32>
    %39 = arith.select %19, %37, %38 : vector<32x32xi1>, vector<32x32xf32>
    %cst_13 = arith.constant dense<0.000000e+00> : vector<32xf32>
    %40 = vector.multi_reduction <add>, %39, %cst_13 [1] : vector<32x32xf32> to vector<32xf32>
    %41 = vector.shape_cast %40 : vector<32xf32> to vector<32x1xf32>
    %cst_14 = arith.constant 0.000000e+00 : f32
    %42 = vector.broadcast %cst_14 : f32 to vector<32x32xf32>
    %43 = arith.select %21, %1, %42 : vector<32x32xi1>, vector<32x32xf32>
    %cst_15 = arith.constant dense<0.000000e+00> : vector<32xf32>
    %44 = vector.multi_reduction <add>, %43, %cst_15 [1] : vector<32x32xf32> to vector<32xf32>
    %45 = vector.shape_cast %44 : vector<32xf32> to vector<32x1xf32>
    %cst_16 = arith.constant 2.000000e-01 : f32
    %46 = vector.broadcast %cst_16 : f32 to vector<32x32xf32>
    %47 = arith.subf %1, %46 : vector<32x32xf32>
    %cst_17 = arith.constant 0.000000e+00 : f32
    %48 = vector.broadcast %cst_17 : f32 to vector<32x32xf32>
    %49 = arith.maximumf %47, %48 : vector<32x32xf32>
    %cst_18 = arith.constant 0.000000e+00 : f32
    %50 = vector.broadcast %cst_18 : f32 to vector<32x32xf32>
    %51 = arith.select %28, %49, %50 : vector<32x32xi1>, vector<32x32xf32>
    %cst_19 = arith.constant dense<0.000000e+00> : vector<32xf32>
    %52 = vector.multi_reduction <add>, %51, %cst_19 [1] : vector<32x32xf32> to vector<32xf32>
    %53 = vector.shape_cast %52 : vector<32xf32> to vector<32x1xf32>
    %54 = vector.extract_strided_slice %4 {offsets = [0, 0], sizes = [1, 8], strides = [1, 1]} : vector<1x32xi32> to vector<1x8xi32>
    %55 = vector.extract_strided_slice %7 {offsets = [0, 0], sizes = [8, 1], strides = [1, 1]} : vector<32x1xi32> to vector<8x1xi32>
    %56 = vector.broadcast %54 : vector<1x8xi32> to vector<8x8xi32>
    %57 = vector.broadcast %55 : vector<8x1xi32> to vector<8x8xi32>
    %58 = arith.cmpi eq, %56, %57 : vector<8x8xi32>
    %cst_20 = arith.constant 0.000000e+00 : f32
    %cst_21 = arith.constant 1.000000e+00 : f32
    %59 = vector.broadcast %cst_20 : f32 to vector<8x8xf32>
    %60 = vector.broadcast %cst_21 : f32 to vector<8x8xf32>
    %61 = arith.select %58, %59, %60 : vector<8x8xi1>, vector<8x8xf32>
    %cst_22 = arith.constant dense<0.000000e+00> : vector<8xf32>
    %62 = vector.multi_reduction <add>, %61, %cst_22 [1] : vector<8x8xf32> to vector<8xf32>
    %63 = vector.shape_cast %62 : vector<8xf32> to vector<8x1xf32>
    %64 = tpu.concatenate %63, %63, %63, %63 in 0 : vector<8x1xf32>, vector<8x1xf32>, vector<8x1xf32>, vector<8x1xf32> -> vector<32x1xf32>
    %cst_23 = arith.constant 0.000000e+00 : f32
    %65 = vector.broadcast %cst_23 : f32 to vector<32x1xf32>
    %66 = arith.cmpf ogt, %33, %65 : vector<32x1xf32>
    %cst_24 = arith.constant 0.000000e+00 : f32
    %67 = vector.broadcast %cst_24 : f32 to vector<32x1xf32>
    %68 = arith.cmpf ogt, %64, %67 : vector<32x1xf32>
    %69 = arith.andi %66, %68 : vector<32x1xi1>
    %cst_25 = arith.constant 1.000000e+00 : f32
    %70 = vector.broadcast %cst_25 : f32 to vector<32x1xf32>
    %71 = arith.maximumf %33, %70 : vector<32x1xf32>
    %72 = arith.divf %41, %71 : vector<32x1xf32>
    %cst_26 = arith.constant 1.000000e+00 : f32
    %73 = vector.broadcast %cst_26 : f32 to vector<32x1xf32>
    %74 = arith.maximumf %64, %73 : vector<32x1xf32>
    %75 = arith.divf %45, %74 : vector<32x1xf32>
    %76 = arith.addf %72, %75 : vector<32x1xf32>
    %cst_27 = arith.constant 0.000000e+00 : f32
    %77 = vector.broadcast %cst_27 : f32 to vector<32x1xf32>
    %78 = arith.select %69, %76, %77 : vector<32x1xi1>, vector<32x1xf32>
    %cst_28 = arith.constant 1.000000e+00 : f32
    %cst_29 = arith.constant 0.000000e+00 : f32
    %79 = vector.broadcast %cst_28 : f32 to vector<32x1xf32>
    %80 = vector.broadcast %cst_29 : f32 to vector<32x1xf32>
    %81 = arith.select %69, %79, %80 : vector<32x1xi1>, vector<32x1xf32>
    %82 = tpu.concatenate %81, %78, %53 in 0 : vector<32x1xf32>, vector<32x1xf32>, vector<32x1xf32> -> vector<96x1xf32>
    %c0_30 = arith.constant 0 : index
    %c0_31 = arith.constant 0 : index
    %83 = vector.load %arg3[%c0_30, %c0_31] : memref<9x96xf32, #tpu.memory_space<vmem>>, vector<9x96xf32>
    %cst_32 = arith.constant dense<0.000000e+00> : vector<9x1xf32>
    %84 = tpu.matmul %83, %82, %cst_32 {dimension_numbers = #tpu.dot_dimension_numbers<[1], [0], [0], [1], [0, 0, 1, 1], [], []>} : vector<9x96xf32>, vector<96x1xf32>, vector<9x1xf32> -> vector<9x1xf32>
    %85 = vector.extract_strided_slice %84 {offsets = [0, 0], sizes = [4, 1], strides = [1, 1]} : vector<9x1xf32> to vector<4x1xf32>
    %86 = vector.extract_strided_slice %84 {offsets = [4, 0], sizes = [4, 1], strides = [1, 1]} : vector<9x1xf32> to vector<4x1xf32>
    %87 = vector.extract_strided_slice %84 {offsets = [8, 0], sizes = [1, 1], strides = [1, 1]} : vector<9x1xf32> to vector<1x1xf32>
    %88 = vector.shape_cast %87 : vector<1x1xf32> to vector<1x1x1xf32>
    %cst_33 = arith.constant dense<0.000000e+00> : vector<1xf32>
    %89 = vector.multi_reduction <add>, %88, %cst_33 [1, 2] : vector<1x1x1xf32> to vector<1xf32>
    %90 = vector.shape_cast %89 : vector<1xf32> to vector<1x1x1xf32>
    %91 = vector.extract %90[0, 0, 0] : f32 from vector<1x1x1xf32>
    %92 = arith.divf %86, %85 : vector<4x1xf32>
    %93 = vector.shape_cast %92 : vector<4x1xf32> to vector<1x4x1xf32>
    %cst_34 = arith.constant dense<0.000000e+00> : vector<1xf32>
    %94 = vector.multi_reduction <add>, %93, %cst_34 [1, 2] : vector<1x4x1xf32> to vector<1xf32>
    %95 = vector.shape_cast %94 : vector<1xf32> to vector<1x1x1xf32>
    %96 = vector.extract %95[0, 0, 0] : f32 from vector<1x1x1xf32>
    %cst_35 = arith.constant 4.000000e+00 : f32
    %97 = arith.divf %96, %cst_35 : f32
    %cst_36 = arith.constant 4.800000e+01 : f32
    %98 = arith.divf %91, %cst_36 : f32
    %cst_37 = arith.constant 5.000000e-02 : f32
    %99 = arith.mulf %cst_37, %98 : f32
    %100 = arith.addf %97, %99 : f32
    %c0_38 = arith.constant 0 : index
    %c0_39 = arith.constant 0 : index
    %101 = memref.load %arg4[%c0_38, %c0_39] : memref<1x1xf32, #tpu.memory_space<smem>>
    memref.store %100, %arg4[%c0_38, %c0_39] : memref<1x1xf32, #tpu.memory_space<smem>>
    return
  }
}

</mosaic_0001>

<llo_original>
// kernel: tpu_custom_call.1
$region0: #{tpu_custom_call.1}
  #allocation0 [shape = 'u32[]', space=smem, size = 0x4, offset = 0x4, fixed_abs, tag = 'smem constant byte address 0x4 - core index']
  #allocation1 [shape = 'u32[72,128]{1,0:T(1,128)}', space=vmem, size = 0x9000, scoped, tag = 'internal scratch']
  %s0 = inlined_call_operand.vmem [shape: f32[32,32], index: 0, kind: input, shape index: {}]
  %s1 = inlined_call_operand.vmem [shape: s32[3,32], index: 1, kind: input, shape index: {}]
  %s2 = inlined_call_operand.vmem [shape: s32[32,3], index: 2, kind: input, shape index: {}]
  %s3 = inlined_call_operand.hbm [shape: f32[9,96], index: 3, kind: input, shape index: {}]
  %s4 = inlined_call_operand.hbm [shape: f32[1,1], index: 4, kind: output, shape index: {}]
  %s5 = sld [smem:[#allocation0]]
  $region30: #{tpu_custom_call.1} parent=0
    _
  %s7 = ssub.s32 1, %s5
  %s8 = scalar_select 0, %s7, %s5
  $region1: #{tpu_custom_call.1} parent=0
    #allocation2 [shape = 'u8[8192]{0}', space=vmem, size = 0x2000, scoped, tag = 'input window, operand 3, single buffered']
    #allocation3 [shape = 's32[1]{0}', space=sflag, size = 0x4, scoped, tag = 'scoped memory for tpu_custom_call.1']
    #allocation4 [shape = 's32[1]{0}', space=sflag, size = 0x4, scoped, tag = 'scoped memory for tpu_custom_call.1']
    #allocation5 [shape = 'u8[512]{0}', space=smem, size = 0x200, scoped, tag = 'output window, operand 0, single buffered']
    %9 = vsyncpa [#allocation3], 0
    %10 = vsyncpa [#allocation4], 0
    // Predicated region
    $region2: #{tpu_custom_call.1} parent=1 // pred_check
      _
    $region3: #{tpu_custom_call.1} parent=1 // pred_check_branch
      %12 = sbr.rel (0) target = $region5
    $region4: #{tpu_custom_call.1} parent=1 // pred_region
      _
    $region5: #{tpu_custom_call.1} parent=1 // pred_fallthru
      _
    // Predicated region
    $region6: #{tpu_custom_call.1} parent=1 // pred_check
      _
    $region7: #{tpu_custom_call.1} parent=1 // pred_check_branch
      %14 = sbr.rel (0) target = $region9
    $region8: #{tpu_custom_call.1} parent=1 // pred_region
      _
    $region9: #{tpu_custom_call.1} parent=1 // pred_fallthru
      _
    // Predicated region
    $region10: #{tpu_custom_call.1} parent=1 // pred_check
      _
    $region11: #{tpu_custom_call.1} parent=1 // pred_check_branch
      %16 = sbr.rel (0) target = $region13
    $region12: #{tpu_custom_call.1} parent=1 // pred_region
      _
    $region13: #{tpu_custom_call.1} parent=1 // pred_fallthru
      _
    // Predicated region
    $region14: #{tpu_custom_call.1} parent=1 // pred_check
      _
    $region15: #{tpu_custom_call.1} parent=1 // pred_check_branch
      %18 = sbr.rel (0) target = $region17
    $region16: #{tpu_custom_call.1} parent=1 // pred_region
      %20 = vsyncadd [#allocation3], 0
      %s21 = sshll.u32 %s3, 4
      %s22 = int_to_ptr.hbm [resolvable:$true] %s21
      %s23 = sshll.u32 [#allocation2], 4
      %s24 = int_to_ptr.vmem [resolvable:$true] %s23
      %29 = dma.hbm_to_vmem [thread:$0]  %s22, 256, %s24, [#allocation3], 128, 128, 8
    $region17: #{tpu_custom_call.1} parent=1 // pred_fallthru
      _
    // Predicated region
    $region18: #{tpu_custom_call.1} parent=1 // pred_check
      _
    $region19: #{tpu_custom_call.1} parent=1 // pred_check_branch
      %31 = sbr.rel (0) target = $region21
    $region20: #{tpu_custom_call.1} parent=1 // pred_region
      %33 = dma.done [#allocation3], 256
    $region21: #{tpu_custom_call.1} parent=1 // pred_fallthru
      _
    %v34 = vld [vmem:[%s0] sm:$0xff]
    %v35 = vld [vmem:[%s0 + $0x8] sm:$0xff]
    %v36 = vld [vmem:[%s0 + $0x10] sm:$0xff]
    %v37 = vld [vmem:[%s0 + $0x18] sm:$0xff]
    %vm38 = vcmask 261120
    %v40 = vsel %vm38, %v34, 0
    %v43 = vsel %vm38, %v35, 0
    %v46 = vsel %vm38, %v36, 0
    %v49 = vsel %vm38, %v37, 0
    %51 = vmatpush.xpose.msra.mxu0 0.0
    %52 = vmatpush.xpose.msra.mxu0 0.0
    %53 = vmatpush.xpose.msra.mxu0 0.0
    %54 = vmatpush.xpose.msra.mxu0 0.0
    %55 = vmatpush.xpose.msra.mxu0 0.0
    %56 = vmatpush.xpose.msra.mxu0 0.0
    %57 = vmatpush.xpose.msra.mxu0 0.0
    %58 = vmatpush.xpose.msra.mxu0 0.0
    %59 = vmatpush.xpose.msra.mxu0 0.0
    %60 = vmatpush.xpose.msra.mxu0 0.0
    %61 = vmatpush.xpose.msra.mxu0 0.0
    %62 = vmatpush.xpose.msra.mxu0 0.0
    %63 = vmatpush.xpose.msra.mxu0 %v49
    %64 = vmatpush.xpose.msra.mxu0 %v46
    %65 = vmatpush.xpose.msra.mxu0 %v43
    %66 = vmatpush.xpose.msra.mxu0 %v40
    %67 = vmatmul.f32.gmra.mxu0 %v40
    %v68 = vpop.f32.mrf.mxu0
    %v69 = vadd.f32 0.0, %v68
    %70 = vmatmul.f32.gmra.mxu0 %v43
    %v71 = vpop.f32.mrf.mxu0
    %v72 = vadd.f32 0.0, %v71
    %73 = vmatmul.f32.gmra.mxu0 %v46
    %v74 = vpop.f32.mrf.mxu0
    %v75 = vadd.f32 0.0, %v74
    %76 = vmatmul.f32.gmra.mxu0 %v49
    %v77 = vpop.f32.mrf.mxu0
    %v78 = vadd.f32 0.0, %v77
    %79 = vdwg.mxu0
    %v80 = vld [vmem:[%s1] sm:$0x7]
    %v81 = vld [vmem:[%s2] sm:$0xff]
    %v82 = vld [vmem:[%s2 + $0x8] sm:$0xff]
    %v83 = vld [vmem:[%s2 + $0x10] sm:$0xff]
    %v84 = vld [vmem:[%s2 + $0x18] sm:$0xff]
    %v85 = vperm.slane %v80, 0
    %86 = vset.pattern.permute.xlu0 0
    %87 = vperm.xlu0 %86, %v81
    %v88 = vpop.permute.xlu0 %87
    %89 = vset.pattern.permute.xlu0 0
    %90 = vperm.xlu0 %89, %v82
    %v91 = vpop.permute.xlu0 %90
    %92 = vset.pattern.permute.xlu0 0
    %93 = vperm.xlu0 %92, %v83
    %v94 = vpop.permute.xlu0 %93
    %95 = vset.pattern.permute.xlu0 0
    %96 = vperm.xlu0 %95, %v84
    %v97 = vpop.permute.xlu0 %96
    %vm98 = vcmp.eq.s32.totalorder %v85, %v88
    %vm99 = vcmp.eq.s32.totalorder %v85, %v91
    %vm100 = vcmp.eq.s32.totalorder %v85, %v94
    %vm101 = vcmp.eq.s32.totalorder %v85, %v97
    %v102 = vperm.slane %v80, 1
    %103 = vset.pattern.permute.xlu0 1
    %104 = vperm.xlu0 %103, %v81
    %v105 = vpop.permute.xlu0 %104
    %106 = vset.pattern.permute.xlu0 1
    %107 = vperm.xlu0 %106, %v82
    %v108 = vpop.permute.xlu0 %107
    %109 = vset.pattern.permute.xlu0 1
    %110 = vperm.xlu0 %109, %v83
    %v111 = vpop.permute.xlu0 %110
    %112 = vset.pattern.permute.xlu0 1
    %113 = vperm.xlu0 %112, %v84
    %v114 = vpop.permute.xlu0 %113
    %vm115 = vcmp.eq.s32.totalorder %v102, %v105
    %vm116 = vcmp.eq.s32.totalorder %v102, %v108
    %vm117 = vcmp.eq.s32.totalorder %v102, %v111
    %vm118 = vcmp.eq.s32.totalorder %v102, %v114
    %vm119 = vmand %vm115, %vm98
    %vm120 = vmand %vm116, %vm99
    %vm121 = vmand %vm117, %vm100
    %vm122 = vmand %vm118, %vm101
    %vm123 = vcmp.lt.f32.partialorder %v69, 1.0
    %vm124 = vcmp.lt.f32.partialorder %v72, 1.0
    %vm125 = vcmp.lt.f32.partialorder %v75, 1.0
    %vm126 = vcmp.lt.f32.partialorder %v78, 1.0
    %vm127 = vmand %vm119, %vm123
    %vm128 = vmand %vm120, %vm124
    %vm129 = vmand %vm121, %vm125
    %vm130 = vmand %vm122, %vm126
    %vm131 = vmxor %vm98, 1
    %vm132 = vmxor %vm99, 1
    %vm133 = vmxor %vm100, 1
    %vm134 = vmxor %vm101, 1
    %vm135 = vmand %vm115, %vm131
    %vm136 = vmand %vm116, %vm132
    %vm137 = vmand %vm117, %vm133
    %vm138 = vmand %vm118, %vm134
    %v139 = vperm.slane %v80, 2
    %140 = vset.pattern.permute.xlu0 2
    %141 = vperm.xlu0 %140, %v81
    %v142 = vpop.permute.xlu0 %141
    %143 = vset.pattern.permute.xlu0 2
    %144 = vperm.xlu0 %143, %v82
    %v145 = vpop.permute.xlu0 %144
    %146 = vset.pattern.permute.xlu0 2
    %147 = vperm.xlu0 %146, %v83
    %v148 = vpop.permute.xlu0 %147
    %149 = vset.pattern.permute.xlu0 2
    %150 = vperm.xlu0 %149, %v84
    %v151 = vpop.permute.xlu0 %150
    %vm152 = vcmp.eq.s32.totalorder %v139, %v142
    %vm153 = vcmp.eq.s32.totalorder %v139, %v145
    %vm154 = vcmp.eq.s32.totalorder %v139, %v148
    %vm155 = vcmp.eq.s32.totalorder %v139, %v151
    %vm156 = vcmp.lt.s32.totalorder %v105, %v102
    %vm157 = vcmp.lt.s32.totalorder %v108, %v102
    %vm158 = vcmp.lt.s32.totalorder %v111, %v102
    %vm159 = vcmp.lt.s32.totalorder %v114, %v102
    %vm160 = vmand %vm152, %vm156
    %vm161 = vmand %vm153, %vm157
    %vm162 = vmand %vm154, %vm158
    %vm163 = vmand %vm155, %vm159
    %v164 = vsel %vm127, 1.0, 0.0
    %v165 = vsel %vm128, 1.0, 0.0
    %v166 = vsel %vm129, 1.0, 0.0
    %v167 = vsel %vm130, 1.0, 0.0
    %v168 = vsel %vm38, %v164, 0.0
    %169 = vadd.xlane.f32.xlu0 %v168
    %v170 = vpop.xlane.xlu0 %169
    %v171 = vsel %vm38, %v165, 0.0
    %172 = vadd.xlane.f32.xlu0 %v171
    %v173 = vpop.xlane.xlu0 %172
    %v174 = vsel %vm38, %v166, 0.0
    %175 = vadd.xlane.f32.xlu0 %v174
    %v176 = vpop.xlane.xlu0 %175
    %v177 = vsel %vm38, %v167, 0.0
    %178 = vadd.xlane.f32.xlu0 %v177
    %v179 = vpop.xlane.xlu0 %178
    %v180 = vsub.f32 0.5, %v69
    %v181 = vsub.f32 0.5, %v72
    %v182 = vsub.f32 0.5, %v75
    %v183 = vsub.f32 0.5, %v78
    %v184 = vmax.f32 %v180, 0.0
    %v185 = vmax.f32 %v181, 0.0
    %v186 = vmax.f32 %v182, 0.0
    %v187 = vmax.f32 %v183, 0.0
    %v188 = vsel %vm127, %v184, 0.0
    %v189 = vsel %vm128, %v185, 0.0
    %v190 = vsel %vm129, %v186, 0.0
    %v191 = vsel %vm130, %v187, 0.0
    %v192 = vsel %vm38, %v188, 0.0
    %193 = vadd.xlane.f32.xlu0 %v192
    %v194 = vpop.xlane.xlu0 %193
    %v195 = vsel %vm38, %v189, 0.0
    %196 = vadd.xlane.f32.xlu0 %v195
    %v197 = vpop.xlane.xlu0 %196
    %v198 = vsel %vm38, %v190, 0.0
    %199 = vadd.xlane.f32.xlu0 %v198
    %v200 = vpop.xlane.xlu0 %199
    %v201 = vsel %vm38, %v191, 0.0
    %202 = vadd.xlane.f32.xlu0 %v201
    %v203 = vpop.xlane.xlu0 %202
    %v204 = vsel %vm135, %v69, 0.0
    %v205 = vsel %vm136, %v72, 0.0
    %v206 = vsel %vm137, %v75, 0.0
    %v207 = vsel %vm138, %v78, 0.0
    %v208 = vsel %vm38, %v204, 0.0
    %209 = vadd.xlane.f32.xlu0 %v208
    %v210 = vpop.xlane.xlu0 %209
    %v211 = vsel %vm38, %v205, 0.0
    %212 = vadd.xlane.f32.xlu0 %v211
    %v213 = vpop.xlane.xlu0 %212
    %v214 = vsel %vm38, %v206, 0.0
    %215 = vadd.xlane.f32.xlu0 %v214
    %v216 = vpop.xlane.xlu0 %215
    %v217 = vsel %vm38, %v207, 0.0
    %218 = vadd.xlane.f32.xlu0 %v217
    %v219 = vpop.xlane.xlu0 %218
    %v220 = vsub.f32 %v69, 0.2
    %v221 = vsub.f32 %v72, 0.2
    %v222 = vsub.f32 %v75, 0.2
    %v223 = vsub.f32 %v78, 0.2
    %v224 = vmax.f32 %v220, 0.0
    %v225 = vmax.f32 %v221, 0.0
    %v226 = vmax.f32 %v222, 0.0
    %v227 = vmax.f32 %v223, 0.0
    %v228 = vsel %vm160, %v224, 0.0
    %v229 = vsel %vm161, %v225, 0.0
    %v230 = vsel %vm162, %v226, 0.0
    %v231 = vsel %vm163, %v227, 0.0
    %v232 = vsel %vm38, %v228, 0.0
    %233 = vadd.xlane.f32.xlu0 %v232
    %v234 = vpop.xlane.xlu0 %233
    %v235 = vsel %vm38, %v229, 0.0
    %236 = vadd.xlane.f32.xlu0 %v235
    %v237 = vpop.xlane.xlu0 %236
    %v238 = vsel %vm38, %v230, 0.0
    %239 = vadd.xlane.f32.xlu0 %v238
    %v240 = vpop.xlane.xlu0 %239
    %v241 = vsel %vm38, %v231, 0.0
    %242 = vadd.xlane.f32.xlu0 %v241
    %v243 = vpop.xlane.xlu0 %242
    %v244 = vsel %vm98, 0.0, 1.0
    %vm245 = vcmask 64512
    %v246 = vsel %vm245, %v244, 0.0
    %247 = vadd.xlane.f32.xlu0 %v246
    %v248 = vpop.xlane.xlu0 %247
    %vm249 = vcmp.gt.f32.partialorder %v170, 0.0
    %vm250 = vcmp.gt.f32.partialorder %v173, 0.0
    %vm251 = vcmp.gt.f32.partialorder %v176, 0.0
    %vm252 = vcmp.gt.f32.partialorder %v179, 0.0
    %vm253 = vcmp.gt.f32.partialorder %v248, 0.0
    %vm254 = vmand %vm249, %vm253
    %vm255 = vmand %vm250, %vm253
    %vm256 = vmand %vm251, %vm253
    %vm257 = vmand %vm252, %vm253
    %v258 = vmax.f32 %v170, 1.0
    %v259 = vmax.f32 %v173, 1.0
    %v260 = vmax.f32 %v176, 1.0
    %v261 = vmax.f32 %v179, 1.0
    %v262 = vrcp.pop %v258
    %v263 = vmul.f32 %v258, %v262
    %v264 = vsub.f32 1.0, %v263
    %v265 = vmul.f32 %v262, %v264
    %v266 = vadd.f32 %v262, %v265
    %vm267 = vweird.f32 %v258
    %vm268 = vweird.f32 %v262
    %vm269 = vmor %vm267, %vm268
    %v270 = vsel %vm269, %v262, %v266
    %v271 = vand.u32 2147483647, %v258
    %vm272 = vcmp.eq.f32.partialorder %v271, 8.507059e+37
    %v273 = vand.u32 %v258, 2147483648
    %v274 = vor.u32 1.1754944e-38, %v273
    %v275 = vsel %vm272, %v274, %v270
    %v276 = vmul.f32 %v194, %v275
    %v277 = vrcp.pop %v259
    %v278 = vmul.f32 %v259, %v277
    %v279 = vsub.f32 1.0, %v278
    %v280 = vmul.f32 %v277, %v279
    %v281 = vadd.f32 %v277, %v280
    %vm282 = vweird.f32 %v259
    %vm283 = vweird.f32 %v277
    %vm284 = vmor %vm282, %vm283
    %v285 = vsel %vm284, %v277, %v281
    %v286 = vand.u32 2147483647, %v259
    %vm287 = vcmp.eq.f32.partialorder %v286, 8.507059e+37
    %v288 = vand.u32 %v259, 2147483648
    %v289 = vor.u32 1.1754944e-38, %v288
    %v290 = vsel %vm287, %v289, %v285
    %v291 = vmul.f32 %v197, %v290
    %v292 = vrcp.pop %v260
    %v293 = vmul.f32 %v260, %v292
    %v294 = vsub.f32 1.0, %v293
    %v295 = vmul.f32 %v292, %v294
    %v296 = vadd.f32 %v292, %v295
    %vm297 = vweird.f32 %v260
    %vm298 = vweird.f32 %v292
    %vm299 = vmor %vm297, %vm298
    %v300 = vsel %vm299, %v292, %v296
    %v301 = vand.u32 2147483647, %v260
    %vm302 = vcmp.eq.f32.partialorder %v301, 8.507059e+37
    %v303 = vand.u32 %v260, 2147483648
    %v304 = vor.u32 1.1754944e-38, %v303
    %v305 = vsel %vm302, %v304, %v300
    %v306 = vmul.f32 %v200, %v305
    %v307 = vrcp.pop %v261
    %v308 = vmul.f32 %v261, %v307
    %v309 = vsub.f32 1.0, %v308
    %v310 = vmul.f32 %v307, %v309
    %v311 = vadd.f32 %v307, %v310
    %vm312 = vweird.f32 %v261
    %vm313 = vweird.f32 %v307
    %vm314 = vmor %vm312, %vm313
    %v315 = vsel %vm314, %v307, %v311
    %v316 = vand.u32 2147483647, %v261
    %vm317 = vcmp.eq.f32.partialorder %v316, 8.507059e+37
    %v318 = vand.u32 %v261, 2147483648
    %v319 = vor.u32 1.1754944e-38, %v318
    %v320 = vsel %vm317, %v319, %v315
    %v321 = vmul.f32 %v203, %v320
    %v322 = vmax.f32 %v248, 1.0
    %v323 = vrcp.pop %v322
    %v324 = vmul.f32 %v322, %v323
    %v325 = vsub.f32 1.0, %v324
    %v326 = vmul.f32 %v323, %v325
    %v327 = vadd.f32 %v323, %v326
    %vm328 = vweird.f32 %v322
    %vm329 = vweird.f32 %v323
    %vm330 = vmor %vm328, %vm329
    %v331 = vsel %vm330, %v323, %v327
    %v332 = vand.u32 2147483647, %v322
    %vm333 = vcmp.eq.f32.partialorder %v332, 8.507059e+37
    %v334 = vand.u32 %v322, 2147483648
    %v335 = vor.u32 1.1754944e-38, %v334
    %v336 = vsel %vm333, %v335, %v331
    %v337 = vmul.f32 %v210, %v336
    %v338 = vmul.f32 %v213, %v336
    %v339 = vmul.f32 %v216, %v336
    %v340 = vmul.f32 %v219, %v336
    %v341 = vadd.f32 %v276, %v337
    %v342 = vadd.f32 %v291, %v338
    %v343 = vadd.f32 %v306, %v339
    %v344 = vadd.f32 %v321, %v340
    %v345 = vsel %vm254, %v341, 0.0
    %v346 = vsel %vm255, %v342, 0.0
    %v347 = vsel %vm256, %v343, 0.0
    %v348 = vsel %vm257, %v344, 0.0
    %v349 = vsel %vm254, 1.0, 0.0
    %v350 = vsel %vm255, 1.0, 0.0
    %v351 = vsel %vm256, 1.0, 0.0
    %v352 = vsel %vm257, 1.0, 0.0
    %v353 = vld [vmem:[#allocation2] sm:$0xff]
    %v354 = vld [vmem:[#allocation2 + $0x8] sm:$0x1]
    %vm355 = vcmask 785408
    %v357 = vsel %vm355, %v353, 0
    %v360 = vsel %vm355, %v354, 0
    %362 = vmatpush.msra.mxu0 0.0
    %363 = vmatpush.msra.mxu0 0.0
    %364 = vmatpush.msra.mxu0 0.0
    %365 = vmatpush.msra.mxu0 0.0
    %366 = vmatpush.msra.mxu0 %v243
    %367 = vmatpush.msra.mxu0 %v240
    %368 = vmatpush.msra.mxu0 %v237
    %369 = vmatpush.msra.mxu0 %v234
    %370 = vmatpush.msra.mxu0 %v348
    %371 = vmatpush.msra.mxu0 %v347
    %372 = vmatpush.msra.mxu0 %v346
    %373 = vmatpush.msra.mxu0 %v345
    %374 = vmatpush.msra.mxu0 %v352
    %375 = vmatpush.msra.mxu0 %v351
    %376 = vmatpush.msra.mxu0 %v350
    %377 = vmatpush.msra.mxu0 %v349
    %378 = vmatmul.f32.gmra.mxu0 %v357
    %v379 = vpop.f32.mrf.mxu0
    %v380 = vadd.f32 0.0, %v379
    %381 = vmatmul.f32.gmra.mxu0 %v360
    %v382 = vpop.f32.mrf.mxu0
    %v383 = vadd.f32 0.0, %v382
    %384 = vdwg.mxu0
    %v385 = vadd.f32 %v383, 0.0
    %s386 = vtos %v385
    %v388 = vrot.slane %v380, 4
    %v390 = vrcp.pop %v388
    %v391 = vmul.f32 %v388, %v390
    %v392 = vsub.f32 1.0, %v391
    %v393 = vmul.f32 %v390, %v392
    %v394 = vadd.f32 %v390, %v393
    %vm395 = vweird.f32 %v388
    %vm396 = vweird.f32 %v390
    %vm397 = vmor %vm395, %vm396
    %v398 = vsel %vm397, %v390, %v394
    %v399 = vand.u32 2147483647, %v388
    %vm400 = vcmp.eq.f32.partialorder %v399, 8.507059e+37
    %v401 = vand.u32 %v388, 2147483648
    %v402 = vor.u32 1.1754944e-38, %v401
    %v403 = vsel %vm400, %v402, %v398
    %v404 = vmul.f32 %v380, %v403
    %v406 = vrot.slane %v404, 4
    %vm408 = vcmask 3072
    %v409 = vsel %vm408, %v406, 0.0
    %410 = vadd.xlane.f32.xlu0 %v409
    %v411 = vpop.xlane.xlu0 %410
    %v412 = vrot.slane %v411, 4
    %v413 = vadd.f32 %v411, %v412
    %v414 = vrot.slane %v413, 2
    %v415 = vadd.f32 %v413, %v414
    %v416 = vrot.slane %v415, 1
    %v417 = vadd.f32 %v415, %v416
    %s418 = vtos %v417
    %v419 = vrcp.pop 4.0
    %v420 = vmul.f32 4.0, %v419
    %v421 = vsub.f32 1.0, %v420
    %v422 = vmul.f32 %v419, %v421
    %v423 = vadd.f32 %v419, %v422
    %vm424 = vweird.f32 %v419
    %v425 = vsel %vm424, %v419, %v423
    %s426 = vtos %v425
    %s427 = smul.f32 %s418, %s426
    %v428 = vrcp.pop 48.0
    %v429 = vmul.f32 48.0, %v428
    %v430 = vsub.f32 1.0, %v429
    %v431 = vmul.f32 %v428, %v430
    %v432 = vadd.f32 %v428, %v431
    %vm433 = vweird.f32 %v428
    %v434 = vsel %vm433, %v428, %v432
    %s435 = vtos %v434
    %s436 = smul.f32 %s386, %s435
    %s437 = smul.f32 %s436, 0.05
    %s438 = sadd.f32 %s427, %s437
    %s439 = scalar_lea.smem [#allocation5], 0
    %440 = sst [smem:[%s439]] %s438
    // Predicated region
    $region22: #{tpu_custom_call.1} parent=1 // pred_check
      _
    $region23: #{tpu_custom_call.1} parent=1 // pred_check_branch
      %442 = sbr.rel (0) target = $region25
    $region24: #{tpu_custom_call.1} parent=1 // pred_region
      %444 = vsyncadd [#allocation4], 0
      %s446 = sshll.u32 %s4, 4
      %s447 = int_to_ptr.hbm [resolvable:$true] %s446
      %449 = dma.smem_to_hbm [#allocation5], 16, %s447, [#allocation4]
    $region25: #{tpu_custom_call.1} parent=1 // pred_fallthru
      _
    // Predicated region
    $region26: #{tpu_custom_call.1} parent=1 // pred_check
      _
    $region27: #{tpu_custom_call.1} parent=1 // pred_check_branch
      %451 = sbr.rel (0) target = $region29
    $region28: #{tpu_custom_call.1} parent=1 // pred_region
      %453 = dma.done [#allocation4], 16
    $region29: #{tpu_custom_call.1} parent=1 // pred_fallthru
      _
    %454 = sfence
    %455 = vsyncpa [#allocation3], 1
    %456 = vsyncpa [#allocation4], 1

</llo_original>
